<compile_context>
chip_gen: v6e
topology: v6e:2x2x1
jax: 0.10.0
libtpu: 0.0.40
codegen_flags: <defaults>
</compile_context>

<pallas_src>
import numpy as np
import jax
import jax.numpy as jnp
from jax.experimental import pallas as pl
from jax.experimental.pallas import tpu as pltpu

_H = 128            # every hidden width (64, 32, 128, 64, 32, 3) padded to 128 lanes
_OUT_PAD = 8        # narrow lane-padded output width (>= 3)
_MAX_SET_CHUNK = 512        # cap on the per-step set-axis chunk length
_MAX_ROWS_PER_STEP = 8192   # review: aim for ~4K-8K element rows per grid step

# Per-row VMEM estimate for a bf16 compute tile.  Accounts for the ~8-16x lane
# inflation of the narrow x block (each 16-row bf16 group occupies a full
# (16,128) tile even though only F_pad lanes hold data):
#   x block (lane padded, double buffered):   2 * 2B * 128   = 512 B
#   fc1 out f32 + bf16 copy:                  (4B + 2B) * 128 = 768 B
#   fc2 out f32 + masked-where temp:          (4B + 4B) * 128 = 1024 B
# -> ~2.3 KiB/row live; budget 2.5 KiB/row so big tiles stay inside the limit.
_ROW_BYTES = 2560


# -----------------------------------------------------------------------------
# Pallas kernel
# -----------------------------------------------------------------------------
def deepsets_kernel(x_ref, lens_ref, inv_ref, w_ref, b_ref, out_ref, acc_ref):
    cdt = x_ref.dtype                 # compute dtype (bf16 or f32)
    TB = out_ref.shape[0]             # batches in this tile
    R, F_pad = x_ref.shape            # R = TB * LK rows, (batch, set-in-chunk) major
    LK = R // TB                      # set-chunk length handled this grid step
    k = pl.program_id(1)

    # packed-weight row offsets (must match the wrapper's packing order)
    o2 = F_pad                        # fc2
    o3 = o2 + _H                      # fc3
    o4 = o3 + _H                      # fc4
    o5 = o4 + _H                      # fc5
    o6 = o5 + _H                      # fc6
    o7 = o6 + _H

    @pl.when(k == 0)
    def _init():
        acc_ref[...] = jnp.zeros_like(acc_ref)

    # per-element MLP (BN1/BN2 folded into fc1/fc2; dropout1/2 = identity in eval)
    x = x_ref[...]                                                        # (R, F_pad)
    h = jnp.dot(x, w_ref[0:o2, :], preferred_element_type=jnp.float32) + b_ref[0:1, :]
    h = jnp.maximum(h, 0.0).astype(cdt)                                   # (R, 128)
    h = jnp.dot(h, w_ref[o2:o3, :], preferred_element_type=jnp.float32) + b_ref[1:2, :]
    h = jnp.maximum(h, 0.0)                                               # (R, 128) f32

    # masked sum over this set chunk, accumulated in f32.
    # (f32 reshape with LK % 8 == 0 is tile-aligned; mask built from an iota
    #  against lane-replicated per-batch lengths -> no (R,1) pool operand.)
    h3 = h.reshape(TB, LK, _H)
    set_idx = k * LK + jax.lax.broadcasted_iota(jnp.int32, (TB, LK, _H), 1)
    valid = set_idx < lens_ref[...][:, None, :]                           # (TB, LK, 128)
    acc_ref[...] += jnp.where(valid, h3, 0.0).sum(axis=1)                 # (TB, 128) f32
    # TODO(synk): for very long chunks the sublane reduce could be moved onto the
    # MXU (block-diagonal selector matmul); LK is capped at 512 so it stays cheap.

    @pl.when(k == pl.num_programs(1) - 1)
    def _head():
        # mean = accumulated masked sum * (1/len), applied once per batch
        pooled = (acc_ref[...] * inv_ref[...]).astype(cdt)                # (TB, 128)
        g = jnp.dot(pooled, w_ref[o3:o4, :], preferred_element_type=jnp.float32) + b_ref[2:3, :]
        g = jnp.maximum(g, 0.0).astype(cdt)
        g = jnp.dot(g, w_ref[o4:o5, :], preferred_element_type=jnp.float32) + b_ref[3:4, :]
        g = jnp.maximum(g, 0.0).astype(cdt)
        g = jnp.dot(g, w_ref[o5:o6, :], preferred_element_type=jnp.float32) + b_ref[4:5, :]
        g = jnp.maximum(g, 0.0).astype(cdt)
        z = (jnp.dot(g, w_ref[o6:o7, :], preferred_element_type=jnp.float32)
             + b_ref[5:6, :])                                             # (TB, 128)
        # numerically stable softplus: max(z, 0) + log(1 + exp(-|z|))
        sp = jnp.maximum(z, 0.0) + jnp.log(1.0 + jnp.exp(-jnp.abs(z)))
        out_ref[...] = sp[:, : out_ref.shape[-1]]                         # narrow store


# -----------------------------------------------------------------------------
# Parameter construction (deterministic, synthetic)
# -----------------------------------------------------------------------------
def init_params(key, num_categories=4, embedding_dim=2):
    ks = jax.random.split(key, 12)

    def linear(k, fin, fout):
        kw, kb = jax.random.split(k)
        bound = 1.0 / float(np.sqrt(fin))
        W = jax.random.uniform(kw, (fin, fout), jnp.float32, -bound, bound)
        b = jax.random.uniform(kb, (1, fout), jnp.float32, -bound, bound)
        return W, b

    def batchnorm(k, n):
        k1, k2, k3, k4 = jax.random.split(k, 4)
        gamma = 1.0 + 0.1 * jax.random.normal(k1, (n,), jnp.float32)
        beta = 0.1 * jax.random.normal(k2, (n,), jnp.float32)
        mean = 0.1 * jax.random.normal(k3, (n,), jnp.float32)
        var = 1.0 + 0.1 * jax.random.uniform(k4, (n,), jnp.float32)
        return gamma, beta, mean, var

    feat_dim = embedding_dim * 2 + 1
    p = {}
    p["embedding"] = jax.random.normal(ks[0], (num_categories, embedding_dim), jnp.float32)
    p["fc1"] = linear(ks[1], feat_dim, 64)
    p["bn1"] = batchnorm(ks[2], 64)
    p["fc2"] = linear(ks[3], 64, 32)
    p["bn2"] = batchnorm(ks[4], 32)
    p["fc3"] = linear(ks[5], 32, 128)
    p["fc4"] = linear(ks[6], 128, 64)
    p["fc5"] = linear(ks[7], 64, 32)
    p["fc6"] = linear(ks[8], 32, 3)
    return p


def _fold_bn(gamma, beta, mean, var, eps=1e-5):
    scale = gamma / jnp.sqrt(var + eps)
    shift = beta - mean * scale
    return scale.reshape(1, -1), shift.reshape(1, -1)


def _round_up(x, m):
    return (x + m - 1) // m * m


def _pad2d(a, rows, cols=_H):
    out = jnp.zeros((rows, cols), jnp.float32)
    return out.at[: a.shape[0], : a.shape[1]].set(a.astype(jnp.float32))


def _vmem_budget():
    """Returns (scoped vmem limit to request, per-grid-step live-data budget)."""
    try:
        cap = int(pltpu.get_tpu_info().vmem_capacity_bytes)   # 64 MiB v7x, 128 MiB v5e/v6e
    except Exception:
        cap = 64 << 20                                        # conservative (v7x) fallback
    limit = min((cap * 3) // 4, 100 << 20)   # ~48 MiB on v7x, ~96 MiB on v5e/v6e
    budget = min((cap * 2) // 5, 48 << 20)   # ~25 MiB on v7x, ~48 MiB on v5e/v6e
    return limit, budget


# -----------------------------------------------------------------------------
# Wrapper: embedding gather / concat / padding / weight packing in JAX,
# all compute in the Pallas kernel.
# -----------------------------------------------------------------------------
def deepsets_forward(state, delta_t, lengths, params, compute_dtype=jnp.bfloat16):
    # compute_dtype=jnp.float32 is the safe choice on v5e (no bf16 VPU).
    B, _, L = state.shape

    # TODO(synk): nn.Embedding gather + concat have no clean blockwise Pallas
    # equivalent at this scale; they stay in plain JAX before the kernel.
    emb = params["embedding"]
    pre_emb = jnp.take(emb, state[:, 0, :] - 1, axis=0)      # (B, L, E)
    post_emb = jnp.take(emb, state[:, 1, :] - 1, axis=0)     # (B, L, E)
    feat = jnp.concatenate(
        [pre_emb, post_emb, delta_t[..., None].astype(jnp.float32)], axis=2)  # (B, L, 2E+1)
    feat_dim = feat.shape[-1]

    # ---- tiling / padding choices -------------------------------------------
    # F padded to 16 so bf16 weight-slab row slices stay sublane-tile aligned.
    F_pad = _round_up(feat_dim, 16)
    L_pad8 = _round_up(L, 8)
    n_k = -(-L_pad8 // _MAX_SET_CHUNK)              # number of set-axis chunks
    LK = _round_up(-(-L_pad8 // n_k), 8)            # chunk length (multiple of 8)
    L_pad = LK * n_k

    vmem_limit, step_budget = _vmem_budget()
    rows_cap = max(LK, min(_MAX_ROWS_PER_STEP, step_budget // _ROW_BYTES))
    TB_cap = max(8, (rows_cap // LK) // 8 * 8)      # batches per tile from VMEM budget
    B_pad8 = _round_up(B, 8)
    if B_pad8 <= TB_cap:
        # whole batch fits one tile: still split in two grid steps when there is
        # enough batch, so v7x megacore gets work on both TensorCores.
        TB = _round_up((B_pad8 + 1) // 2, 8) if B_pad8 >= 16 else B_pad8
    else:
        TB = TB_cap
    B_pad = _round_up(B, TB)
    n_i = B_pad // TB
    R = TB * LK

    # layout invariants the kernel's reshape-based pooling relies on
    assert TB % 8 == 0 and LK % 8 == 0
    assert B_pad % TB == 0 and L_pad % LK == 0 and L_pad == n_k * LK

    # ---- inputs ---------------------------------------------------------------
    # x rows are ordered (set-chunk, batch, in-chunk) major so every (i, k) grid
    # step maps to one contiguous lane-dense 2-D block.
    x3 = jnp.zeros((B_pad, L_pad, F_pad), compute_dtype)
    x3 = x3.at[:B, :L, :feat_dim].set(feat.astype(compute_dtype))
    x_rows = (x3.reshape(B_pad, n_k, LK, F_pad)
                .transpose(1, 0, 2, 3)
                .reshape(n_k * B_pad * LK, F_pad))

    # per-batch lengths / reciprocal lengths, lane-replicated (no (R,1) operand).
    # NOTE: matches the PyTorch module -- no guard against lengths == 0.
    lens_rep = jnp.zeros((B_pad, _H), jnp.int32).at[:B, :].set(
        lengths.astype(jnp.int32)[:, None])                   # padded batches: len = 0
    inv_rep = jnp.ones((B_pad, _H), jnp.float32).at[:B, :].set(
        (1.0 / lengths.astype(jnp.float32))[:, None])         # padded batches: 1.0

    # ---- fold BatchNorm (eval) into fc1 / fc2 and pack parameters -------------
    w1, b1 = params["fc1"]; s1, t1 = _fold_bn(*params["bn1"])
    w2, b2 = params["fc2"]; s2, t2 = _fold_bn(*params["bn2"])
    w1f, c1 = w1 * s1, b1 * s1 + t1
    w2f, c2 = w2 * s2, b2 * s2 + t2
    w3, b3 = params["fc3"]
    w4, b4 = params["fc4"]
    w5, b5 = params["fc5"]
    w6, b6 = params["fc6"]

    slab = jnp.concatenate(
        [_pad2d(w1f, F_pad), _pad2d(w2f, _H), _pad2d(w3, _H),
         _pad2d(w4, _H), _pad2d(w5, _H), _pad2d(w6, _H)],
        axis=0).astype(compute_dtype)                          # (F_pad + 5*128, 128)
    biases = jnp.zeros((8, _H), jnp.float32)
    for idx, b in enumerate((c1, c2, b3, b4, b5, b6)):
        biases = biases.at[idx, : b.shape[-1]].set(b.reshape(-1).astype(jnp.float32))
    n_wrows = slab.shape[0]

    out = pl.pallas_call(
        deepsets_kernel,
        out_shape=jax.ShapeDtypeStruct((B_pad, _OUT_PAD), jnp.float32),
        grid_spec=pltpu.PrefetchScalarGridSpec(
            num_scalar_prefetch=0,
            grid=(n_i, n_k),
            in_specs=[
                pl.BlockSpec((R, F_pad), lambda i, k: (k * n_i + i, 0)),   # x rows
                pl.BlockSpec((TB, _H), lambda i, k: (i, 0)),               # lengths (lane-rep)
                pl.BlockSpec((TB, _H), lambda i, k: (i, 0)),               # 1/len  (lane-rep)
                pl.BlockSpec((n_wrows, _H), lambda i, k: (0, 0)),          # packed weights
                pl.BlockSpec((8, _H), lambda i, k: (0, 0)),                # packed biases
            ],
            out_specs=pl.BlockSpec((TB, _OUT_PAD), lambda i, k: (i, 0)),   # narrow output
            scratch_shapes=[pltpu.VMEM((TB, _H), jnp.float32)],            # pooled accumulator
        ),
        compiler_params=pltpu.CompilerParams(
            dimension_semantics=("parallel", "arbitrary"),
            vmem_limit_bytes=int(vmem_limit),
        ),
    )(x_rows, lens_rep, inv_rep, slab, biases)

    return out[:B, :3]


# -----------------------------------------------------------------------------
# Pure-JAX reference (direct port of the PyTorch forward, eval mode, f32)
# -----------------------------------------------------------------------------
def reference_forward(state, delta_t, lengths, params):
    B, _, L = state.shape
    emb = params["embedding"]
    pre_emb = jnp.take(emb, state[:, 0, :] - 1, axis=0)
    post_emb = jnp.take(emb, state[:, 1, :] - 1, axis=0)
    x = jnp.concatenate([pre_emb, post_emb, delta_t[..., None].astype(jnp.float32)], axis=2)
    x = x.reshape(-1, x.shape[-1])

    w1, b1 = params["fc1"]
    s1, t1 = _fold_bn(*params["bn1"])
    x = jax.nn.relu((x @ w1 + b1) * s1 + t1)
    w2, b2 = params["fc2"]
    s2, t2 = _fold_bn(*params["bn2"])
    x = jax.nn.relu((x @ w2 + b2) * s2 + t2)

    x = x.reshape(B, L, -1)
    mask = (jnp.arange(L)[None, :] < lengths[:, None]).astype(jnp.float32)[..., None]
    x_mean = (x * mask).sum(axis=1) / lengths[:, None].astype(jnp.float32)

    w3, b3 = params["fc3"]
    w4, b4 = params["fc4"]
    w5, b5 = params["fc5"]
    w6, b6 = params["fc6"]
    x = jax.nn.relu(x_mean @ w3 + b3)
    x = jax.nn.relu(x @ w4 + b4)
    x = jax.nn.relu(x @ w5 + b5)
    return jax.nn.softplus(x @ w6 + b6)


if __name__ == "__main__":
    key = jax.random.PRNGKey(0)
    k_param, k_data = jax.random.split(key)

    num_categories, embedding_dim = 4, 2
    params = init_params(k_param, num_categories, embedding_dim)

    def make_inputs(k, B, L):
        ks, kd, kl = jax.random.split(k, 3)
        # state values in [1, num_categories] (the forward does `.long() - 1`)
        state = jax.random.randint(ks, (B, 2, L), 1, num_categories + 1, dtype=jnp.int32)
        delta_t = jax.random.uniform(kd, (B, L), jnp.float32)
        lengths = jax.random.randint(kl, (B,), 1, L + 1, dtype=jnp.int32)
        return state, delta_t, lengths

    # (4, 8): single tile; (50, 20): 2 batch tiles ("parallel" axis);
    # (6, 700): 2 set-axis chunks (exercises the pooled accumulator path).
    cases = [(4, 8), (50, 20), (6, 700)]
    keys = jax.random.split(k_data, len(cases))
    for kk, (B, L) in zip(keys, cases):
        state, delta_t, lengths = make_inputs(kk, B, L)
        out = jax.block_until_ready(deepsets_forward(state, delta_t, lengths, params))
        ref = reference_forward(state, delta_t, lengths, params)
        # tolerance relaxed for bf16 activations/weights (f32 MXU accumulation)
        np.testing.assert_allclose(np.asarray(out), np.asarray(ref), rtol=5e-2, atol=5e-2)

    print("KERNEL_OK")
</pallas_src>

<mosaic_0001>
module attributes {stable_mosaic.version = 11 : i64} {
  func.func @deepsets_kernel(%arg0: i32, %arg1: i32, %arg2: memref<64x16xbf16, #tpu.memory_space<vmem>>, %arg3: memref<8x128xi32, #tpu.memory_space<vmem>>, %arg4: memref<8x128xf32, #tpu.memory_space<vmem>>, %arg5: memref<656x128xbf16, #tpu.memory_space<vmem>>, %arg6: memref<8x128xf32, #tpu.memory_space<vmem>>, %arg7: memref<8x8xf32, #tpu.memory_space<vmem>>, %arg8: memref<8x128xf32, #tpu.memory_space<vmem>>) attributes {dimension_semantics = [#tpu.dimension_semantics<parallel>, #tpu.dimension_semantics<arbitrary>], iteration_bounds = array<i64: 1, 1>, scalar_prefetch = 0 : i64, scratch_operands = 1 : i64, tpu.core_type = #tpu.core_type<tc>, window_params = [{transform_indices = @transform_0, window_bounds = array<i64: 64, 16>}, {transform_indices = @transform_1, window_bounds = array<i64: 8, 128>}, {transform_indices = @transform_2, window_bounds = array<i64: 8, 128>}, {pipeline_mode = #tpu.pipeline_mode<synchronous>, transform_indices = @transform_3, window_bounds = array<i64: 656, 128>}, {pipeline_mode = #tpu.pipeline_mode<synchronous>, transform_indices = @transform_4, window_bounds = array<i64: 8, 128>}, {transform_indices = @transform_5, window_bounds = array<i64: 8, 8>}]} {
    %c0_i32 = arith.constant 0 : i32
    %0 = arith.cmpi eq, %arg1, %c0_i32 : i32
    %1 = arith.extui %0 : i1 to i32
    %c0_i32_0 = arith.constant 0 : i32
    %2 = arith.cmpi ne, %1, %c0_i32_0 : i32
    scf.if %2 {
      %cst_21 = arith.constant 0.000000e+00 : f32
      %37 = vector.broadcast %cst_21 : f32 to vector<8x128xf32>
      %c0_22 = arith.constant 0 : index
      %c0_23 = arith.constant 0 : index
      %38 = vector.load %arg8[%c0_22, %c0_23] : memref<8x128xf32, #tpu.memory_space<vmem>>, vector<8x128xf32>
      tpu.vector_store %arg8[%c0_22, %c0_23], %37 {strides = array<i32>} : memref<8x128xf32, #tpu.memory_space<vmem>>, vector<8x128xf32>,
    } else {
    }
    %c0 = arith.constant 0 : index
    %c0_1 = arith.constant 0 : index
    %3 = vector.load %arg2[%c0, %c0_1] : memref<64x16xbf16, #tpu.memory_space<vmem>>, vector<64x16xbf16>
    %c0_2 = arith.constant 0 : index
    %c0_3 = arith.constant 0 : index
    %4 = vector.load %arg5[%c0_2, %c0_3] : memref<656x128xbf16, #tpu.memory_space<vmem>>, vector<16x128xbf16>
    %cst = arith.constant dense<0.000000e+00> : vector<64x128xf32>
    %5 = tpu.matmul %3, %4, %cst {dimension_numbers = #tpu.dot_dimension_numbers<[1], [0], [0], [1], [0, 0, 1, 1], [], []>} : vector<64x16xbf16>, vector<16x128xbf16>, vector<64x128xf32> -> vector<64x128xf32>
    %c0_4 = arith.constant 0 : index
    %c0_5 = arith.constant 0 : index
    %6 = vector.load %arg6[%c0_4, %c0_5] : memref<8x128xf32, #tpu.memory_space<vmem>>, vector<1x128xf32>
    %7 = vector.broadcast %6 : vector<1x128xf32> to vector<64x128xf32>
    %8 = arith.addf %5, %7 : vector<64x128xf32>
    %cst_6 = arith.constant 0.000000e+00 : f32
    %9 = vector.broadcast %cst_6 : f32 to vector<64x128xf32>
    %10 = arith.maximumf %8, %9 : vector<64x128xf32>
    %11 = arith.truncf %10 : vector<64x128xf32> to vector<64x128xbf16>
    %c16 = arith.constant 16 : index
    %c0_7 = arith.constant 0 : index
    %12 = vector.load %arg5[%c16, %c0_7] : memref<656x128xbf16, #tpu.memory_space<vmem>>, vector<128x128xbf16>
    %cst_8 = arith.constant dense<0.000000e+00> : vector<64x128xf32>
    %13 = tpu.matmul %11, %12, %cst_8 {dimension_numbers = #tpu.dot_dimension_numbers<[1], [0], [0], [1], [0, 0, 1, 1], [], []>} : vector<64x128xbf16>, vector<128x128xbf16>, vector<64x128xf32> -> vector<64x128xf32>
    %c1 = arith.constant 1 : index
    %c0_9 = arith.constant 0 : index
    %14 = vector.load %arg6[%c1, %c0_9] : memref<8x128xf32, #tpu.memory_space<vmem>>, vector<1x128xf32>
    %15 = vector.broadcast %14 : vector<1x128xf32> to vector<64x128xf32>
    %16 = arith.addf %13, %15 : vector<64x128xf32>
    %cst_10 = arith.constant 0.000000e+00 : f32
    %17 = vector.broadcast %cst_10 : f32 to vector<64x128xf32>
    %18 = arith.maximumf %16, %17 : vector<64x128xf32>
    %19 = vector.shape_cast %18 : vector<64x128xf32> to vector<8x8x128xf32>
    %c8_i32 = arith.constant 8 : i32
    %20 = arith.muli %arg1, %c8_i32 : i32
    %21 = tpu.iota {dimensions = array<i32: 1>} : vector<8x8x128xi32>
    %22 = vector.broadcast %20 : i32 to vector<8x8x128xi32>
    %23 = arith.addi %22, %21 : vector<8x8x128xi32>
    %c0_11 = arith.constant 0 : index
    %c0_12 = arith.constant 0 : index
    %24 = vector.load %arg3[%c0_11, %c0_12] : memref<8x128xi32, #tpu.memory_space<vmem>>, vector<8x128xi32>
    %25 = vector.shape_cast %24 : vector<8x128xi32> to vector<8x1x128xi32>
    %26 = vector.broadcast %25 : vector<8x1x128xi32> to vector<8x8x128xi32>
    %27 = arith.cmpi slt, %23, %26 : vector<8x8x128xi32>
    %c0_13 = arith.constant 0 : index
    %c0_14 = arith.constant 0 : index
    %28 = vector.load %arg8[%c0_13, %c0_14] : memref<8x128xf32, #tpu.memory_space<vmem>>, vector<8x128xf32>
    %cst_15 = arith.constant 0.000000e+00 : f32
    %29 = vector.broadcast %cst_15 : f32 to vector<8x8x128xf32>
    %30 = arith.select %27, %19, %29 : vector<8x8x128xi1>, vector<8x8x128xf32>
    %cst_16 = arith.constant dense<0.000000e+00> : vector<8x128xf32>
    %31 = vector.multi_reduction <add>, %30, %cst_16 [1] : vector<8x8x128xf32> to vector<8x128xf32>
    %32 = arith.addf %28, %31 : vector<8x128xf32>
    %c0_17 = arith.constant 0 : index
    %c0_18 = arith.constant 0 : index
    %33 = vector.load %arg8[%c0_17, %c0_18] : memref<8x128xf32, #tpu.memory_space<vmem>>, vector<8x128xf32>
    tpu.vector_store %arg8[%c0_17, %c0_18], %32 {strides = array<i32>} : memref<8x128xf32, #tpu.memory_space<vmem>>, vector<8x128xf32>,
    %c0_i32_19 = arith.constant 0 : i32
    %34 = arith.cmpi eq, %arg1, %c0_i32_19 : i32
    %35 = arith.extui %34 : i1 to i32
    %c0_i32_20 = arith.constant 0 : i32
    %36 = arith.cmpi ne, %35, %c0_i32_20 : i32
    scf.if %36 {
      %c0_21 = arith.constant 0 : index
      %c0_22 = arith.constant 0 : index
      %37 = vector.load %arg8[%c0_21, %c0_22] : memref<8x128xf32, #tpu.memory_space<vmem>>, vector<8x128xf32>
      %c0_23 = arith.constant 0 : index
      %c0_24 = arith.constant 0 : index
      %38 = vector.load %arg4[%c0_23, %c0_24] : memref<8x128xf32, #tpu.memory_space<vmem>>, vector<8x128xf32>
      %39 = arith.mulf %37, %38 : vector<8x128xf32>
      %40 = arith.truncf %39 : vector<8x128xf32> to vector<8x128xbf16>
      %c144 = arith.constant 144 : index
      %c0_25 = arith.constant 0 : index
      %41 = vector.load %arg5[%c144, %c0_25] : memref<656x128xbf16, #tpu.memory_space<vmem>>, vector<128x128xbf16>
      %cst_26 = arith.constant dense<0.000000e+00> : vector<8x128xf32>
      %42 = tpu.matmul %40, %41, %cst_26 {dimension_numbers = #tpu.dot_dimension_numbers<[1], [0], [0], [1], [0, 0, 1, 1], [], []>} : vector<8x128xbf16>, vector<128x128xbf16>, vector<8x128xf32> -> vector<8x128xf32>
      %c2 = arith.constant 2 : index
      %c0_27 = arith.constant 0 : index
      %43 = vector.load %arg6[%c2, %c0_27] : memref<8x128xf32, #tpu.memory_space<vmem>>, vector<1x128xf32>
      %44 = vector.broadcast %43 : vector<1x128xf32> to vector<8x128xf32>
      %45 = arith.addf %42, %44 : vector<8x128xf32>
      %cst_28 = arith.constant 0.000000e+00 : f32
      %46 = vector.broadcast %cst_28 : f32 to vector<8x128xf32>
      %47 = arith.maximumf %45, %46 : vector<8x128xf32>
      %48 = arith.truncf %47 : vector<8x128xf32> to vector<8x128xbf16>
      %c272 = arith.constant 272 : index
      %c0_29 = arith.constant 0 : index
      %49 = vector.load %arg5[%c272, %c0_29] : memref<656x128xbf16, #tpu.memory_space<vmem>>, vector<128x128xbf16>
      %cst_30 = arith.constant dense<0.000000e+00> : vector<8x128xf32>
      %50 = tpu.matmul %48, %49, %cst_30 {dimension_numbers = #tpu.dot_dimension_numbers<[1], [0], [0], [1], [0, 0, 1, 1], [], []>} : vector<8x128xbf16>, vector<128x128xbf16>, vector<8x128xf32> -> vector<8x128xf32>
      %c3 = arith.constant 3 : index
      %c0_31 = arith.constant 0 : index
      %51 = vector.load %arg6[%c3, %c0_31] : memref<8x128xf32, #tpu.memory_space<vmem>>, vector<1x128xf32>
      %52 = vector.broadcast %51 : vector<1x128xf32> to vector<8x128xf32>
      %53 = arith.addf %50, %52 : vector<8x128xf32>
      %cst_32 = arith.constant 0.000000e+00 : f32
      %54 = vector.broadcast %cst_32 : f32 to vector<8x128xf32>
      %55 = arith.maximumf %53, %54 : vector<8x128xf32>
      %56 = arith.truncf %55 : vector<8x128xf32> to vector<8x128xbf16>
      %c400 = arith.constant 400 : index
      %c0_33 = arith.constant 0 : index
      %57 = vector.load %arg5[%c400, %c0_33] : memref<656x128xbf16, #tpu.memory_space<vmem>>, vector<128x128xbf16>
      %cst_34 = arith.constant dense<0.000000e+00> : vector<8x128xf32>
      %58 = tpu.matmul %56, %57, %cst_34 {dimension_numbers = #tpu.dot_dimension_numbers<[1], [0], [0], [1], [0, 0, 1, 1], [], []>} : vector<8x128xbf16>, vector<128x128xbf16>, vector<8x128xf32> -> vector<8x128xf32>
      %c4 = arith.constant 4 : index
      %c0_35 = arith.constant 0 : index
      %59 = vector.load %arg6[%c4, %c0_35] : memref<8x128xf32, #tpu.memory_space<vmem>>, vector<1x128xf32>
      %60 = vector.broadcast %59 : vector<1x128xf32> to vector<8x128xf32>
      %61 = arith.addf %58, %60 : vector<8x128xf32>
      %cst_36 = arith.constant 0.000000e+00 : f32
      %62 = vector.broadcast %cst_36 : f32 to vector<8x128xf32>
      %63 = arith.maximumf %61, %62 : vector<8x128xf32>
      %64 = arith.truncf %63 : vector<8x128xf32> to vector<8x128xbf16>
      %c528 = arith.constant 528 : index
      %c0_37 = arith.constant 0 : index
      %65 = vector.load %arg5[%c528, %c0_37] : memref<656x128xbf16, #tpu.memory_space<vmem>>, vector<128x128xbf16>
      %cst_38 = arith.constant dense<0.000000e+00> : vector<8x128xf32>
      %66 = tpu.matmul %64, %65, %cst_38 {dimension_numbers = #tpu.dot_dimension_numbers<[1], [0], [0], [1], [0, 0, 1, 1], [], []>} : vector<8x128xbf16>, vector<128x128xbf16>, vector<8x128xf32> -> vector<8x128xf32>
      %c5 = arith.constant 5 : index
      %c0_39 = arith.constant 0 : index
      %67 = vector.load %arg6[%c5, %c0_39] : memref<8x128xf32, #tpu.memory_space<vmem>>, vector<1x128xf32>
      %68 = vector.broadcast %67 : vector<1x128xf32> to vector<8x128xf32>
      %69 = arith.addf %66, %68 : vector<8x128xf32>
      %cst_40 = arith.constant 0.000000e+00 : f32
      %70 = vector.broadcast %cst_40 : f32 to vector<8x128xf32>
      %71 = arith.maximumf %69, %70 : vector<8x128xf32>
      %72 = math.absf %69 : vector<8x128xf32>
      %cst_41 = arith.constant 0.000000e+00 : f32
      %73 = vector.broadcast %cst_41 : f32 to vector<8x128xf32>
      %74 = arith.subf %73, %72 : vector<8x128xf32>
      %75 = math.exp %74 : vector<8x128xf32>
      %cst_42 = arith.constant 1.000000e+00 : f32
      %76 = vector.broadcast %cst_42 : f32 to vector<8x128xf32>
      %77 = arith.addf %76, %75 : vector<8x128xf32>
      %78 = math.log %77 : vector<8x128xf32>
      %79 = arith.addf %71, %78 : vector<8x128xf32>
      %80 = vector.extract_strided_slice %79 {offsets = [0, 0], sizes = [8, 8], strides = [1, 1]} : vector<8x128xf32> to vector<8x8xf32>
      %c0_43 = arith.constant 0 : index
      %c0_44 = arith.constant 0 : index
      %81 = vector.load %arg7[%c0_43, %c0_44] : memref<8x8xf32, #tpu.memory_space<vmem>>, vector<8x8xf32>
      tpu.vector_store %arg7[%c0_43, %c0_44], %80 {strides = array<i32>} : memref<8x8xf32, #tpu.memory_space<vmem>>, vector<8x8xf32>,
    } else {
    }
    return
  }
  func.func @transform_0(%arg0: i32, %arg1: i32) -> (i32, i32) {
    %c1_i32 = arith.constant 1 : i32
    %0 = arith.muli %arg1, %c1_i32 : i32
    %1 = arith.addi %0, %arg0 : i32
    %c0_i32 = arith.constant 0 : i32
    %c0_i32_0 = arith.constant 0 : i32
    return %1, %c0_i32 : i32, i32
  }
  func.func @transform_1(%arg0: i32, %arg1: i32) -> (i32, i32) {
    %c0_i32 = arith.constant 0 : i32
    %c0_i32_0 = arith.constant 0 : i32
    return %arg0, %c0_i32 : i32, i32
  }
  func.func @transform_2(%arg0: i32, %arg1: i32) -> (i32, i32) {
    %c0_i32 = arith.constant 0 : i32
    %c0_i32_0 = arith.constant 0 : i32
    return %arg0, %c0_i32 : i32, i32
  }
  func.func @transform_3(%arg0: i32, %arg1: i32) -> (i32, i32) {
    %c0_i32 = arith.constant 0 : i32
    %c0_i32_0 = arith.constant 0 : i32
    %c0_i32_1 = arith.constant 0 : i32
    return %c0_i32, %c0_i32_0 : i32, i32
  }
  func.func @transform_4(%arg0: i32, %arg1: i32) -> (i32, i32) {
    %c0_i32 = arith.constant 0 : i32
    %c0_i32_0 = arith.constant 0 : i32
    %c0_i32_1 = arith.constant 0 : i32
    return %c0_i32, %c0_i32_0 : i32, i32
  }
  func.func @transform_5(%arg0: i32, %arg1: i32) -> (i32, i32) {
    %c0_i32 = arith.constant 0 : i32
    %c0_i32_0 = arith.constant 0 : i32
    return %arg0, %c0_i32 : i32, i32
  }
}

</mosaic_0001>

<llo_original>
// kernel: tpu_custom_call.1
$region0: #{tpu_custom_call.1}
  #allocation0 [shape = 'u32[]', space=smem, size = 0x4, offset = 0x4, fixed_abs, tag = 'smem constant byte address 0x4 - core index']
  #allocation1 [shape = 'u32[144,128]{1,0:T(1,128)}', space=vmem, size = 0x12000, scoped, tag = 'internal scratch']
  #allocation2 [shape = 'f32[8,128]{1,0:T(8,128)}', space=vmem, size = 0x1000, scoped, tag = 'scratch operand']
  %s0 = inlined_call_operand.vmem [shape: bf16[64,16], index: 0, kind: input, shape index: {}]
  %s1 = inlined_call_operand.vmem [shape: s32[8,128], index: 1, kind: input, shape index: {}]
  %s2 = inlined_call_operand.vmem [shape: f32[8,128], index: 2, kind: input, shape index: {}]
  %s3 = inlined_call_operand.hbm [shape: bf16[656,128], index: 3, kind: input, shape index: {}]
  %s4 = inlined_call_operand.vmem [shape: f32[8,128], index: 4, kind: input, shape index: {}]
  %s5 = inlined_call_operand.hbm [shape: f32[8,8], index: 5, kind: output, shape index: {}]
  %s6 = sld [smem:[#allocation0]]
  $region42: #{tpu_custom_call.1} parent=0
    _
  %s8 = ssub.s32 1, %s6
  %s9 = scalar_select 0, %s8, %s6
  $region1: #{tpu_custom_call.1} parent=0
    #allocation3 [shape = 'u8[167936]{0}', space=vmem, size = 0x29000, scoped, tag = 'input window, operand 3, single buffered']
    #allocation4 [shape = 's32[1]{0}', space=sflag, size = 0x4, scoped, tag = 'scoped memory for tpu_custom_call.1']
    #allocation5 [shape = 's32[1]{0}', space=sflag, size = 0x4, scoped, tag = 'scoped memory for tpu_custom_call.1']
    #allocation6 [shape = 'u8[4096]{0}', space=vmem, size = 0x1000, scoped, tag = 'output window, operand 0, single buffered']
    %10 = vsyncpa [#allocation4], 0
    %11 = vsyncpa [#allocation5], 0
    // Predicated region
    $region2: #{tpu_custom_call.1} parent=1 // pred_check
      _
    $region3: #{tpu_custom_call.1} parent=1 // pred_check_branch
      %13 = sbr.rel (0) target = $region5
    $region4: #{tpu_custom_call.1} parent=1 // pred_region
      %s14 = sadd.s32 0, 0
      %s15 = smul.u32 8, %s14
      %p16 = scmp.lt.s32.totalorder %s15, 7
      %s17 = scalar_select %p16, %s15, 7
      %s18 = smul.addr %s17, 4
      %s19 = scalar_lea.vmem %s0, %s18
      %s20 = sadd.s32 0, 0
      %s21 = smul.u32 8, %s20
    $region5: #{tpu_custom_call.1} parent=1 // pred_fallthru
      _
    // Predicated region
    $region6: #{tpu_custom_call.1} parent=1 // pred_check
      _
    $region7: #{tpu_custom_call.1} parent=1 // pred_check_branch
      %23 = sbr.rel (0) target = $region9
    $region8: #{tpu_custom_call.1} parent=1 // pred_region
      _
    $region9: #{tpu_custom_call.1} parent=1 // pred_fallthru
      _
    // Predicated region
    $region10: #{tpu_custom_call.1} parent=1 // pred_check
      _
    $region11: #{tpu_custom_call.1} parent=1 // pred_check_branch
      %25 = sbr.rel (0) target = $region13
    $region12: #{tpu_custom_call.1} parent=1 // pred_region
      _
    $region13: #{tpu_custom_call.1} parent=1 // pred_fallthru
      _
    // Predicated region
    $region14: #{tpu_custom_call.1} parent=1 // pred_check
      _
    $region15: #{tpu_custom_call.1} parent=1 // pred_check_branch
      %27 = sbr.rel (0) target = $region17
    $region16: #{tpu_custom_call.1} parent=1 // pred_region
      %s29 = ssub.s32 5248, 5248
      %30 = vsyncadd [#allocation4], %s29
      %s31 = sshll.u32 [#allocation3], 4
      %s32 = int_to_ptr.vmem [resolvable:$true] %s31
      %37 = dma.hbm_to_vmem [thread:$0]  %s3, 5248, %s32, [#allocation4], 64, 64, 4
    $region17: #{tpu_custom_call.1} parent=1 // pred_fallthru
      _
    // Predicated region
    $region18: #{tpu_custom_call.1} parent=1 // pred_check
      _
    $region19: #{tpu_custom_call.1} parent=1 // pred_check_branch
      %39 = sbr.rel (0) target = $region21
    $region20: #{tpu_custom_call.1} parent=1 // pred_region
      _
    $region21: #{tpu_custom_call.1} parent=1 // pred_fallthru
      _
    // Predicated region
    $region22: #{tpu_custom_call.1} parent=1 // pred_check
      _
    $region23: #{tpu_custom_call.1} parent=1 // pred_check_branch
      %41 = sbr.rel (0) target = $region25
    $region24: #{tpu_custom_call.1} parent=1 // pred_region
      %42 = dma.done [#allocation4], 5248
    $region25: #{tpu_custom_call.1} parent=1 // pred_fallthru
      _
    %s43 = sadd.s32 0, 0
    %s44 = smul.u32 8, %s43
    %p45 = scmp.lt.s32.totalorder %s44, 7
    %s46 = scalar_select %p45, %s44, 7
    %s47 = smul.addr %s46, 4
    %s48 = scalar_lea.vmem %s0, %s47
    %s49 = sadd.s32 0, 0
    %s50 = smul.u32 8, %s49
    %p51 = scmp.lt.s32.totalorder %s50, 7
    %s52 = scalar_select %p51, %s50, 7
    %s53 = smul.addr %s52, 4
    %s54 = scalar_lea.vmem %s0, %s53
    %s55 = sadd.s32 0, 0
    %s56 = smul.u32 8, %s55
    %p58 = scmp.eq.s32.totalorder 0, 0
    // Predicated region
    $region26: #{tpu_custom_call.1} parent=1 // pred_check
      %p59 = pneg %p58
    $region27: #{tpu_custom_call.1} parent=1 // pred_check_branch
      %61 = sbr.rel (%p59) target = $region29
    $region28: #{tpu_custom_call.1} parent=1 // pred_region
      %62 = vst [vmem:[#allocation2] sm:$0xff] 0.0
    $region29: #{tpu_custom_call.1} parent=1 // pred_fallthru
      _
    %v63 = vld [vmem:[%s54] sm:$0xf]
    %v64 = vld [vmem:[%s54 + $0x4] sm:$0xf]
    %v65 = vld [vmem:[%s54 + $0x8] sm:$0xf]
    %v66 = vld [vmem:[%s54 + $0xc] sm:$0xf]
    %v67 = vld [vmem:[%s54 + $0x10] sm:$0xf]
    %v68 = vld [vmem:[%s54 + $0x14] sm:$0xf]
    %v69 = vld [vmem:[%s54 + $0x18] sm:$0xf]
    %v70 = vld [vmem:[%s54 + $0x1c] sm:$0xf]
    %v71 = vld [vmem:[#allocation3] sm:$0xf]
    %v72 = vld [vmem:[#allocation3 + $0x4] sm:$0xf]
    %v73 = vld [vmem:[%s4] sm:$0x1]
    %v74 = vlaneseq
    %v75 = vshrl.u32 %v74, 7
    %v76 = vsub.s32 0, %v75
    %v77 = vrot.slane %v73, %v76
    %v86 = vunpack.c.l.b16 %v63
    %v87 = vunpack.c.l.b16 %v64
    %v88 = vunpack.c.l.b16 %v65
    %v89 = vunpack.c.l.b16 %v66
    %v90 = vunpack.c.l.b16 %v67
    %v91 = vunpack.c.l.b16 %v68
    %v92 = vunpack.c.l.b16 %v69
    %v93 = vunpack.c.l.b16 %v70
    %v94 = vpack.c.b16 %v87, %v86
    %v95 = vpack.c.b16 %v89, %v88
    %v96 = vpack.c.b16 %v91, %v90
    %v97 = vpack.c.b16 %v93, %v92
    %v100 = vunpack.c.l.b16 %v71
    %v101 = vunpack.c.l.b16 %v72
    %v102 = vpack.c.b16 %v101, %v100
    %vm104 = vcmask 130048
    %v106 = vsel %vm104, %v94, 0
    %v109 = vsel %vm104, %v95, 0
    %v112 = vsel %vm104, %v96, 0
    %v115 = vsel %vm104, %v97, 0
    %117 = vmatprep.subr.bf16.mxu0 0
    %118 = vmatpush1.bf16.msra.mxu0 0
    %119 = vmatprep.subr.bf16.mxu0 0
    %120 = vmatpush1.bf16.msra.mxu0 0
    %121 = vmatprep.subr.bf16.mxu0 0
    %122 = vmatpush1.bf16.msra.mxu0 0
    %123 = vmatprep.subr.bf16.mxu0 0
    %124 = vmatpush1.bf16.msra.mxu0 0
    %125 = vmatprep.subr.bf16.mxu0 0
    %126 = vmatpush1.bf16.msra.mxu0 0
    %127 = vmatprep.subr.bf16.mxu0 0
    %128 = vmatpush1.bf16.msra.mxu0 0
    %129 = vmatprep.subr.bf16.mxu0 0
    %130 = vmatpush1.bf16.msra.mxu0 0
    %131 = vmatprep.subr.bf16.mxu0 0
    %132 = vmatpush1.bf16.msra.mxu0 %v102
    %133 = vmatprep.subr.bf16.mxu0 0
    %134 = vmatpush2.bf16.msra.mxu0 0
    %135 = vmatprep.subr.bf16.mxu0 0
    %136 = vmatpush2.bf16.msra.mxu0 0
    %137 = vmatprep.subr.bf16.mxu0 0
    %138 = vmatpush2.bf16.msra.mxu0 0
    %139 = vmatprep.subr.bf16.mxu0 0
    %140 = vmatpush2.bf16.msra.mxu0 0
    %141 = vmatprep.subr.bf16.mxu0 0
    %142 = vmatpush2.bf16.msra.mxu0 0
    %143 = vmatprep.subr.bf16.mxu0 0
    %144 = vmatpush2.bf16.msra.mxu0 0
    %145 = vmatprep.subr.bf16.mxu0 0
    %146 = vmatpush2.bf16.msra.mxu0 0
    %147 = vmatprep.subr.bf16.mxu0 0
    %148 = vmatpush2.bf16.msra.mxu0 0
    %149 = vmatprep.mubr.bf16.mxu0 0
    %150 = vmatmul.mubr.bf16.gmra.mxu0 %v106
    %v151 = vpop.f32.mrf.mxu0
    %v152 = vadd.f32 %v77, %v151
    %v153 = vpop.f32.mrf.mxu0
    %v154 = vpop.f32.mrf.mxu0
    %v155 = vadd.f32 %v77, %v154
    %v156 = vpop.f32.mrf.mxu0
    %157 = vmatprep.mubr.bf16.mxu0 0
    %158 = vmatmul.mubr.bf16.gmra.mxu0 %v109
    %v159 = vpop.f32.mrf.mxu0
    %v160 = vadd.f32 %v77, %v159
    %v161 = vpop.f32.mrf.mxu0
    %v162 = vpop.f32.mrf.mxu0
    %v163 = vadd.f32 %v77, %v162
    %v164 = vpop.f32.mrf.mxu0
    %165 = vmatprep.mubr.bf16.mxu0 0
    %166 = vmatmul.mubr.bf16.gmra.mxu0 %v112
    %v167 = vpop.f32.mrf.mxu0
    %v168 = vadd.f32 %v77, %v167
    %v169 = vpop.f32.mrf.mxu0
    %v170 = vpop.f32.mrf.mxu0
    %v171 = vadd.f32 %v77, %v170
    %v172 = vpop.f32.mrf.mxu0
    %173 = vmatprep.mubr.bf16.mxu0 0
    %174 = vmatmul.mubr.bf16.gmra.mxu0 %v115
    %v175 = vpop.f32.mrf.mxu0
    %v176 = vadd.f32 %v77, %v175
    %v177 = vpop.f32.mrf.mxu0
    %v178 = vpop.f32.mrf.mxu0
    %v179 = vadd.f32 %v77, %v178
    %v180 = vpop.f32.mrf.mxu0
    %181 = vdwg.mxu0
    %v182 = vmax.f32 %v152, 0.0
    %v183 = vmax.f32 %v155, 0.0
    %v184 = vmax.f32 %v160, 0.0
    %v185 = vmax.f32 %v163, 0.0
    %v186 = vmax.f32 %v168, 0.0
    %v187 = vmax.f32 %v171, 0.0
    %v188 = vmax.f32 %v176, 0.0
    %v189 = vmax.f32 %v179, 0.0
    %v190 = vpack.c.bf16 %v183, %v182
    %v191 = vpack.c.bf16 %v185, %v184
    %v192 = vpack.c.bf16 %v187, %v186
    %v193 = vpack.c.bf16 %v189, %v188
    %v194 = vld [vmem:[#allocation3 + $0x8] sm:$0xf]
    %v195 = vld [vmem:[#allocation3 + $0xc] sm:$0xf]
    %v196 = vld [vmem:[#allocation3 + $0x10] sm:$0xf]
    %v197 = vld [vmem:[#allocation3 + $0x14] sm:$0xf]
    %v198 = vld [vmem:[#allocation3 + $0x18] sm:$0xf]
    %v199 = vld [vmem:[#allocation3 + $0x1c] sm:$0xf]
    %v200 = vld [vmem:[#allocation3 + $0x20] sm:$0xf]
    %v201 = vld [vmem:[#allocation3 + $0x24] sm:$0xf]
    %v202 = vld [vmem:[#allocation3 + $0x28] sm:$0xf]
    %v203 = vld [vmem:[#allocation3 + $0x2c] sm:$0xf]
    %v204 = vld [vmem:[#allocation3 + $0x30] sm:$0xf]
    %v205 = vld [vmem:[#allocation3 + $0x34] sm:$0xf]
    %v206 = vld [vmem:[#allocation3 + $0x38] sm:$0xf]
    %v207 = vld [vmem:[#allocation3 + $0x3c] sm:$0xf]
    %v208 = vld [vmem:[#allocation3 + $0x40] sm:$0xf]
    %v209 = vld [vmem:[#allocation3 + $0x44] sm:$0xf]
    %v210 = vld [vmem:[%s4 + $0x1] sm:$0x1]
    %v211 = vlaneseq
    %v212 = vshrl.u32 %v211, 7
    %v213 = vsub.s32 0, %v212
    %v214 = vrot.slane %v210, %v213
    %v231 = vunpack.c.l.b16 %v194
    %v232 = vunpack.c.l.b16 %v195
    %v233 = vunpack.c.l.b16 %v196
    %v234 = vunpack.c.l.b16 %v197
    %v235 = vunpack.c.l.b16 %v198
    %v236 = vunpack.c.l.b16 %v199
    %v237 = vunpack.c.l.b16 %v200
    %v238 = vunpack.c.l.b16 %v201
    %v239 = vunpack.c.l.b16 %v202
    %v240 = vunpack.c.l.b16 %v203
    %v241 = vunpack.c.l.b16 %v204
    %v242 = vunpack.c.l.b16 %v205
    %v243 = vunpack.c.l.b16 %v206
    %v244 = vunpack.c.l.b16 %v207
    %v245 = vunpack.c.l.b16 %v208
    %v246 = vunpack.c.l.b16 %v209
    %v247 = vpack.c.b16 %v232, %v231
    %v248 = vpack.c.b16 %v234, %v233
    %v249 = vpack.c.b16 %v236, %v235
    %v250 = vpack.c.b16 %v238, %v237
    %v251 = vpack.c.b16 %v240, %v239
    %v252 = vpack.c.b16 %v242, %v241
    %v253 = vpack.c.b16 %v244, %v243
    %v254 = vpack.c.b16 %v246, %v245
    %263 = vmatprep.subr.bf16.mxu0 0
    %264 = vmatpush1.bf16.msra.mxu0 %v254
    %265 = vmatprep.subr.bf16.mxu0 0
    %266 = vmatpush1.bf16.msra.mxu0 %v253
    %267 = vmatprep.subr.bf16.mxu0 0
    %268 = vmatpush1.bf16.msra.mxu0 %v252
    %269 = vmatprep.subr.bf16.mxu0 0
    %270 = vmatpush1.bf16.msra.mxu0 %v251
    %271 = vmatprep.subr.bf16.mxu0 0
    %272 = vmatpush1.bf16.msra.mxu0 %v250
    %273 = vmatprep.subr.bf16.mxu0 0
    %274 = vmatpush1.bf16.msra.mxu0 %v249
    %275 = vmatprep.subr.bf16.mxu0 0
    %276 = vmatpush1.bf16.msra.mxu0 %v248
    %277 = vmatprep.subr.bf16.mxu0 0
    %278 = vmatpush1.bf16.msra.mxu0 %v247
    %279 = vmatprep.subr.bf16.mxu0 0
    %280 = vmatpush2.bf16.msra.mxu0 0
    %281 = vmatprep.subr.bf16.mxu0 0
    %282 = vmatpush2.bf16.msra.mxu0 0
    %283 = vmatprep.subr.bf16.mxu0 0
    %284 = vmatpush2.bf16.msra.mxu0 0
    %285 = vmatprep.subr.bf16.mxu0 0
    %286 = vmatpush2.bf16.msra.mxu0 0
    %287 = vmatprep.subr.bf16.mxu0 0
    %288 = vmatpush2.bf16.msra.mxu0 0
    %289 = vmatprep.subr.bf16.mxu0 0
    %290 = vmatpush2.bf16.msra.mxu0 0
    %291 = vmatprep.subr.bf16.mxu0 0
    %292 = vmatpush2.bf16.msra.mxu0 0
    %293 = vmatprep.subr.bf16.mxu0 0
    %294 = vmatpush2.bf16.msra.mxu0 0
    %295 = vmatprep.mubr.bf16.mxu0 0
    %296 = vmatmul.mubr.bf16.gmra.mxu0 %v190
    %v297 = vpop.f32.mrf.mxu0
    %v298 = vadd.f32 %v214, %v297
    %v299 = vpop.f32.mrf.mxu0
    %v300 = vpop.f32.mrf.mxu0
    %v301 = vadd.f32 %v214, %v300
    %v302 = vpop.f32.mrf.mxu0
    %303 = vmatprep.mubr.bf16.mxu0 0
    %304 = vmatmul.mubr.bf16.gmra.mxu0 %v191
    %v305 = vpop.f32.mrf.mxu0
    %v306 = vadd.f32 %v214, %v305
    %v307 = vpop.f32.mrf.mxu0
    %v308 = vpop.f32.mrf.mxu0
    %v309 = vadd.f32 %v214, %v308
    %v310 = vpop.f32.mrf.mxu0
    %311 = vmatprep.mubr.bf16.mxu0 0
    %312 = vmatmul.mubr.bf16.gmra.mxu0 %v192
    %v313 = vpop.f32.mrf.mxu0
    %v314 = vadd.f32 %v214, %v313
    %v315 = vpop.f32.mrf.mxu0
    %v316 = vpop.f32.mrf.mxu0
    %v317 = vadd.f32 %v214, %v316
    %v318 = vpop.f32.mrf.mxu0
    %319 = vmatprep.mubr.bf16.mxu0 0
    %320 = vmatmul.mubr.bf16.gmra.mxu0 %v193
    %v321 = vpop.f32.mrf.mxu0
    %v322 = vadd.f32 %v214, %v321
    %v323 = vpop.f32.mrf.mxu0
    %v324 = vpop.f32.mrf.mxu0
    %v325 = vadd.f32 %v214, %v324
    %v326 = vpop.f32.mrf.mxu0
    %327 = vdwg.mxu0
    %v328 = vmax.f32 %v298, 0.0
    %v329 = vmax.f32 %v301, 0.0
    %v330 = vmax.f32 %v306, 0.0
    %v331 = vmax.f32 %v309, 0.0
    %v332 = vmax.f32 %v314, 0.0
    %v333 = vmax.f32 %v317, 0.0
    %v334 = vmax.f32 %v322, 0.0
    %v335 = vmax.f32 %v325, 0.0
    %s336 = smul.u32 0, 8
    %v337 = vlaneseq
    %v338 = vshrl.u32 %v337, 7
    %v339 = vstv %s336
    %v340 = vadd.s32 %v339, %v338
    %v341 = vld [vmem:[%s1] sm:$0xff]
    %v342 = vcombine.high %v341, %v341
    %v344 = vunpack.c.l.s4 1966171168
    %v345 = vunpack.c.0.s8 %v344
    %v346 = vlaneseq
    %v347 = vshrl.u32 %v346, 7
    %v348 = vsub.s32 %v345, %v347
    %v349 = vrot.slane %v341, %v348
    %v351 = vunpack.c.l.s4 1966171168
    %v352 = vunpack.c.0.s8 %v351
    %v353 = vlaneseq
    %v354 = vshrl.u32 %v353, 7
    %v355 = vsub.s32 %v352, %v354
    %v356 = vrot.slane %v342, %v355
    %v357 = vcombine.high %v349, %v349
    %v358 = vcombine.high %v356, %v356
    %v360 = vunpack.c.l.s4 1966171168
    %v361 = vunpack.c.0.s8 %v360
    %v362 = vlaneseq
    %v363 = vshrl.u32 %v362, 7
    %v364 = vsub.s32 %v361, %v363
    %v365 = vrot.slane %v349, %v364
    %v367 = vunpack.c.l.s4 1966171168
    %v368 = vunpack.c.0.s8 %v367
    %v369 = vlaneseq
    %v370 = vshrl.u32 %v369, 7
    %v371 = vsub.s32 %v368, %v370
    %v372 = vrot.slane %v356, %v371
    %v374 = vunpack.c.l.s4 1966171168
    %v375 = vunpack.c.0.s8 %v374
    %v376 = vlaneseq
    %v377 = vshrl.u32 %v376, 7
    %v378 = vsub.s32 %v375, %v377
    %v379 = vrot.slane %v357, %v378
    %v381 = vunpack.c.l.s4 1966171168
    %v382 = vunpack.c.0.s8 %v381
    %v383 = vlaneseq
    %v384 = vshrl.u32 %v383, 7
    %v385 = vsub.s32 %v382, %v384
    %v386 = vrot.slane %v358, %v385
    %v387 = vcombine.high %v365, %v365
    %v388 = vcombine.high %v372, %v372
    %v389 = vcombine.high %v379, %v379
    %v390 = vcombine.high %v386, %v386
    %v391 = vlaneseq
    %v392 = vshrl.u32 %v391, 7
    %v393 = vsub.s32 0, %v392
    %v394 = vrot.slane %v365, %v393
    %v395 = vlaneseq
    %v396 = vshrl.u32 %v395, 7
    %v397 = vsub.s32 0, %v396
    %v398 = vrot.slane %v379, %v397
    %v399 = vlaneseq
    %v400 = vshrl.u32 %v399, 7
    %v401 = vsub.s32 0, %v400
    %v402 = vrot.slane %v387, %v401
    %v403 = vlaneseq
    %v404 = vshrl.u32 %v403, 7
    %v405 = vsub.s32 0, %v404
    %v406 = vrot.slane %v389, %v405
    %v407 = vlaneseq
    %v408 = vshrl.u32 %v407, 7
    %v409 = vsub.s32 0, %v408
    %v410 = vrot.slane %v372, %v409
    %v411 = vlaneseq
    %v412 = vshrl.u32 %v411, 7
    %v413 = vsub.s32 0, %v412
    %v414 = vrot.slane %v386, %v413
    %v415 = vlaneseq
    %v416 = vshrl.u32 %v415, 7
    %v417 = vsub.s32 0, %v416
    %v418 = vrot.slane %v388, %v417
    %v419 = vlaneseq
    %v420 = vshrl.u32 %v419, 7
    %v421 = vsub.s32 0, %v420
    %v422 = vrot.slane %v390, %v421
    %vm423 = vcmp.lt.s32.totalorder %v340, %v394
    %vm424 = vcmp.lt.s32.totalorder %v340, %v398
    %vm425 = vcmp.lt.s32.totalorder %v340, %v402
    %vm426 = vcmp.lt.s32.totalorder %v340, %v406
    %vm427 = vcmp.lt.s32.totalorder %v340, %v410
    %vm428 = vcmp.lt.s32.totalorder %v340, %v414
    %vm429 = vcmp.lt.s32.totalorder %v340, %v418
    %vm430 = vcmp.lt.s32.totalorder %v340, %v422
    %v431 = vld [vmem:[#allocation2] sm:$0xff]
    %v432 = vsel %vm423, %v328, 0.0
    %v433 = vsel %vm424, %v329, 0.0
    %v434 = vsel %vm425, %v330, 0.0
    %v435 = vsel %vm426, %v331, 0.0
    %v436 = vsel %vm427, %v332, 0.0
    %v437 = vsel %vm428, %v333, 0.0
    %v438 = vsel %vm429, %v334, 0.0
    %v439 = vsel %vm430, %v335, 0.0
    %v440 = vrot.slane %v432, 4
    %v441 = vadd.f32 %v432, %v440
    %v442 = vrot.slane %v441, 2
    %v443 = vadd.f32 %v441, %v442
    %v444 = vrot.slane %v443, 1
    %v445 = vadd.f32 %v443, %v444
    %v446 = vrot.slane %v433, 4
    %v447 = vadd.f32 %v433, %v446
    %v448 = vrot.slane %v447, 2
    %v449 = vadd.f32 %v447, %v448
    %v450 = vrot.slane %v449, 1
    %v451 = vadd.f32 %v449, %v450
    %v452 = vrot.slane %v434, 4
    %v453 = vadd.f32 %v434, %v452
    %v454 = vrot.slane %v453, 2
    %v455 = vadd.f32 %v453, %v454
    %v456 = vrot.slane %v455, 1
    %v457 = vadd.f32 %v455, %v456
    %v458 = vrot.slane %v435, 4
    %v459 = vadd.f32 %v435, %v458
    %v460 = vrot.slane %v459, 2
    %v461 = vadd.f32 %v459, %v460
    %v462 = vrot.slane %v461, 1
    %v463 = vadd.f32 %v461, %v462
    %v464 = vrot.slane %v436, 4
    %v465 = vadd.f32 %v436, %v464
    %v466 = vrot.slane %v465, 2
    %v467 = vadd.f32 %v465, %v466
    %v468 = vrot.slane %v467, 1
    %v469 = vadd.f32 %v467, %v468
    %v470 = vrot.slane %v437, 4
    %v471 = vadd.f32 %v437, %v470
    %v472 = vrot.slane %v471, 2
    %v473 = vadd.f32 %v471, %v472
    %v474 = vrot.slane %v473, 1
    %v475 = vadd.f32 %v473, %v474
    %v476 = vrot.slane %v438, 4
    %v477 = vadd.f32 %v438, %v476
    %v478 = vrot.slane %v477, 2
    %v479 = vadd.f32 %v477, %v478
    %v480 = vrot.slane %v479, 1
    %v481 = vadd.f32 %v479, %v480
    %v482 = vrot.slane %v439, 4
    %v483 = vadd.f32 %v439, %v482
    %v484 = vrot.slane %v483, 2
    %v485 = vadd.f32 %v483, %v484
    %v486 = vrot.slane %v485, 1
    %v487 = vadd.f32 %v485, %v486
    %vm496 = vcmask 1041409
    %v497 = vsel %vm496, %v451, %v445
    %vm498 = vcmask 1042434
    %v499 = vsel %vm498, %v457, %v497
    %vm500 = vcmask 1043459
    %v501 = vsel %vm500, %v463, %v499
    %vm502 = vcmask 1044484
    %v503 = vsel %vm502, %v469, %v501
    %vm504 = vcmask 1045509
    %v505 = vsel %vm504, %v475, %v503
    %vm506 = vcmask 1046534
    %v507 = vsel %vm506, %v481, %v505
    %vm508 = vcmask 1047559
    %v509 = vsel %vm508, %v487, %v507
    %v511 = vadd.f32 %v431, %v509
    %512 = vst [vmem:[#allocation2] sm:$0xff] %v511
    // Predicated region
    $region30: #{tpu_custom_call.1} parent=1 // pred_check
      %p513 = pneg %p58
    $region31: #{tpu_custom_call.1} parent=1 // pred_check_branch
      %515 = sbr.rel (%p513) target = $region33
    $region32: #{tpu_custom_call.1} parent=1 // pred_region
      %v516 = vld [vmem:[#allocation2] sm:$0xff]
      %v517 = vld [vmem:[%s2] sm:$0xff]
      %v518 = vmul.f32 %v516, %v517
      %v519 = vpack.c.bf16 %v518, %v518
      %v520 = vld [vmem:[#allocation3 + $0x48] sm:$0xf]
      %v521 = vld [vmem:[#allocation3 + $0x4c] sm:$0xf]
      %v522 = vld [vmem:[#allocation3 + $0x50] sm:$0xf]
      %v523 = vld [vmem:[#allocation3 + $0x54] sm:$0xf]
      %v524 = vld [vmem:[#allocation3 + $0x58] sm:$0xf]
      %v525 = vld [vmem:[#allocation3 + $0x5c] sm:$0xf]
      %v526 = vld [vmem:[#allocation3 + $0x60] sm:$0xf]
      %v527 = vld [vmem:[#allocation3 + $0x64] sm:$0xf]
      %v528 = vld [vmem:[#allocation3 + $0x68] sm:$0xf]
      %v529 = vld [vmem:[#allocation3 + $0x6c] sm:$0xf]
      %v530 = vld [vmem:[#allocation3 + $0x70] sm:$0xf]
      %v531 = vld [vmem:[#allocation3 + $0x74] sm:$0xf]
      %v532 = vld [vmem:[#allocation3 + $0x78] sm:$0xf]
      %v533 = vld [vmem:[#allocation3 + $0x7c] sm:$0xf]
      %v534 = vld [vmem:[#allocation3 + $0x80] sm:$0xf]
      %v535 = vld [vmem:[#allocation3 + $0x84] sm:$0xf]
      %v536 = vld [vmem:[%s4 + $0x2] sm:$0x1]
      %v537 = vlaneseq
      %v538 = vshrl.u32 %v537, 7
      %v539 = vsub.s32 0, %v538
      %v540 = vrot.slane %v536, %v539
      %v557 = vunpack.c.l.b16 %v520
      %v558 = vunpack.c.l.b16 %v521
      %v559 = vunpack.c.l.b16 %v522
      %v560 = vunpack.c.l.b16 %v523
      %v561 = vunpack.c.l.b16 %v524
      %v562 = vunpack.c.l.b16 %v525
      %v563 = vunpack.c.l.b16 %v526
      %v564 = vunpack.c.l.b16 %v527
      %v565 = vunpack.c.l.b16 %v528
      %v566 = vunpack.c.l.b16 %v529
      %v567 = vunpack.c.l.b16 %v530
      %v568 = vunpack.c.l.b16 %v531
      %v569 = vunpack.c.l.b16 %v532
      %v570 = vunpack.c.l.b16 %v533
      %v571 = vunpack.c.l.b16 %v534
      %v572 = vunpack.c.l.b16 %v535
      %v573 = vpack.c.b16 %v558, %v557
      %v574 = vpack.c.b16 %v560, %v559
      %v575 = vpack.c.b16 %v562, %v561
      %v576 = vpack.c.b16 %v564, %v563
      %v577 = vpack.c.b16 %v566, %v565
      %v578 = vpack.c.b16 %v568, %v567
      %v579 = vpack.c.b16 %v570, %v569
      %v580 = vpack.c.b16 %v572, %v571
      %589 = vmatprep.subr.bf16.mxu0 0
      %590 = vmatpush1.bf16.msra.mxu0 %v580
      %591 = vmatprep.subr.bf16.mxu0 0
      %592 = vmatpush1.bf16.msra.mxu0 %v579
      %593 = vmatprep.subr.bf16.mxu0 0
      %594 = vmatpush1.bf16.msra.mxu0 %v578
      %595 = vmatprep.subr.bf16.mxu0 0
      %596 = vmatpush1.bf16.msra.mxu0 %v577
      %597 = vmatprep.subr.bf16.mxu0 0
      %598 = vmatpush1.bf16.msra.mxu0 %v576
      %599 = vmatprep.subr.bf16.mxu0 0
      %600 = vmatpush1.bf16.msra.mxu0 %v575
      %601 = vmatprep.subr.bf16.mxu0 0
      %602 = vmatpush1.bf16.msra.mxu0 %v574
      %603 = vmatprep.subr.bf16.mxu0 0
      %604 = vmatpush1.bf16.msra.mxu0 %v573
      %605 = vmatprep.subr.bf16.mxu0 0
      %606 = vmatpush2.bf16.msra.mxu0 0
      %607 = vmatprep.subr.bf16.mxu0 0
      %608 = vmatpush2.bf16.msra.mxu0 0
      %609 = vmatprep.subr.bf16.mxu0 0
      %610 = vmatpush2.bf16.msra.mxu0 0
      %611 = vmatprep.subr.bf16.mxu0 0
      %612 = vmatpush2.bf16.msra.mxu0 0
      %613 = vmatprep.subr.bf16.mxu0 0
      %614 = vmatpush2.bf16.msra.mxu0 0
      %615 = vmatprep.subr.bf16.mxu0 0
      %616 = vmatpush2.bf16.msra.mxu0 0
      %617 = vmatprep.subr.bf16.mxu0 0
      %618 = vmatpush2.bf16.msra.mxu0 0
      %619 = vmatprep.subr.bf16.mxu0 0
      %620 = vmatpush2.bf16.msra.mxu0 0
      %621 = vmatprep.mubr.bf16.mxu0 0
      %622 = vmatmul.mubr.bf16.gmra.mxu0 %v519
      %v623 = vpop.f32.mrf.mxu0
      %v624 = vadd.f32 %v540, %v623
      %v625 = vpop.f32.mrf.mxu0
      %v626 = vpop.f32.mrf.mxu0
      %v627 = vpop.f32.mrf.mxu0
      %628 = vdwg.mxu0
      %v629 = vmax.f32 %v624, 0.0
      %v630 = vpack.c.bf16 %v629, %v629
      %v631 = vld [vmem:[#allocation3 + $0x88] sm:$0xf]
      %v632 = vld [vmem:[#allocation3 + $0x8c] sm:$0xf]
      %v633 = vld [vmem:[#allocation3 + $0x90] sm:$0xf]
      %v634 = vld [vmem:[#allocation3 + $0x94] sm:$0xf]
      %v635 = vld [vmem:[#allocation3 + $0x98] sm:$0xf]
      %v636 = vld [vmem:[#allocation3 + $0x9c] sm:$0xf]
      %v637 = vld [vmem:[#allocation3 + $0xa0] sm:$0xf]
      %v638 = vld [vmem:[#allocation3 + $0xa4] sm:$0xf]
      %v639 = vld [vmem:[#allocation3 + $0xa8] sm:$0xf]
      %v640 = vld [vmem:[#allocation3 + $0xac] sm:$0xf]
      %v641 = vld [vmem:[#allocation3 + $0xb0] sm:$0xf]
      %v642 = vld [vmem:[#allocation3 + $0xb4] sm:$0xf]
      %v643 = vld [vmem:[#allocation3 + $0xb8] sm:$0xf]
      %v644 = vld [vmem:[#allocation3 + $0xbc] sm:$0xf]
      %v645 = vld [vmem:[#allocation3 + $0xc0] sm:$0xf]
      %v646 = vld [vmem:[#allocation3 + $0xc4] sm:$0xf]
      %v647 = vld [vmem:[%s4 + $0x3] sm:$0x1]
      %v648 = vlaneseq
      %v649 = vshrl.u32 %v648, 7
      %v650 = vsub.s32 0, %v649
      %v651 = vrot.slane %v647, %v650
      %v668 = vunpack.c.l.b16 %v631
      %v669 = vunpack.c.l.b16 %v632
      %v670 = vunpack.c.l.b16 %v633
      %v671 = vunpack.c.l.b16 %v634
      %v672 = vunpack.c.l.b16 %v635
      %v673 = vunpack.c.l.b16 %v636
      %v674 = vunpack.c.l.b16 %v637
      %v675 = vunpack.c.l.b16 %v638
      %v676 = vunpack.c.l.b16 %v639
      %v677 = vunpack.c.l.b16 %v640
      %v678 = vunpack.c.l.b16 %v641
      %v679 = vunpack.c.l.b16 %v642
      %v680 = vunpack.c.l.b16 %v643
      %v681 = vunpack.c.l.b16 %v644
      %v682 = vunpack.c.l.b16 %v645
      %v683 = vunpack.c.l.b16 %v646
      %v684 = vpack.c.b16 %v669, %v668
      %v685 = vpack.c.b16 %v671, %v670
      %v686 = vpack.c.b16 %v673, %v672
      %v687 = vpack.c.b16 %v675, %v674
      %v688 = vpack.c.b16 %v677, %v676
      %v689 = vpack.c.b16 %v679, %v678
      %v690 = vpack.c.b16 %v681, %v680
      %v691 = vpack.c.b16 %v683, %v682
      %700 = vmatprep.subr.bf16.mxu0 0
      %701 = vmatpush1.bf16.msra.mxu0 %v691
      %702 = vmatprep.subr.bf16.mxu0 0
      %703 = vmatpush1.bf16.msra.mxu0 %v690
      %704 = vmatprep.subr.bf16.mxu0 0
      %705 = vmatpush1.bf16.msra.mxu0 %v689
      %706 = vmatprep.subr.bf16.mxu0 0
      %707 = vmatpush1.bf16.msra.mxu0 %v688
      %708 = vmatprep.subr.bf16.mxu0 0
      %709 = vmatpush1.bf16.msra.mxu0 %v687
      %710 = vmatprep.subr.bf16.mxu0 0
      %711 = vmatpush1.bf16.msra.mxu0 %v686
      %712 = vmatprep.subr.bf16.mxu0 0
      %713 = vmatpush1.bf16.msra.mxu0 %v685
      %714 = vmatprep.subr.bf16.mxu0 0
      %715 = vmatpush1.bf16.msra.mxu0 %v684
      %716 = vmatprep.subr.bf16.mxu0 0
      %717 = vmatpush2.bf16.msra.mxu0 0
      %718 = vmatprep.subr.bf16.mxu0 0
      %719 = vmatpush2.bf16.msra.mxu0 0
      %720 = vmatprep.subr.bf16.mxu0 0
      %721 = vmatpush2.bf16.msra.mxu0 0
      %722 = vmatprep.subr.bf16.mxu0 0
      %723 = vmatpush2.bf16.msra.mxu0 0
      %724 = vmatprep.subr.bf16.mxu0 0
      %725 = vmatpush2.bf16.msra.mxu0 0
      %726 = vmatprep.subr.bf16.mxu0 0
      %727 = vmatpush2.bf16.msra.mxu0 0
      %728 = vmatprep.subr.bf16.mxu0 0
      %729 = vmatpush2.bf16.msra.mxu0 0
      %730 = vmatprep.subr.bf16.mxu0 0
      %731 = vmatpush2.bf16.msra.mxu0 0
      %732 = vmatprep.mubr.bf16.mxu0 0
      %733 = vmatmul.mubr.bf16.gmra.mxu0 %v630
      %v734 = vpop.f32.mrf.mxu0
      %v735 = vadd.f32 %v651, %v734
      %v736 = vpop.f32.mrf.mxu0
      %v737 = vpop.f32.mrf.mxu0
      %v738 = vpop.f32.mrf.mxu0
      %739 = vdwg.mxu0
      %v740 = vmax.f32 %v735, 0.0
      %v741 = vpack.c.bf16 %v740, %v740
      %v742 = vld [vmem:[#allocation3 + $0xc8] sm:$0xf]
      %v743 = vld [vmem:[#allocation3 + $0xcc] sm:$0xf]
      %v744 = vld [vmem:[#allocation3 + $0xd0] sm:$0xf]
      %v745 = vld [vmem:[#allocation3 + $0xd4] sm:$0xf]
      %v746 = vld [vmem:[#allocation3 + $0xd8] sm:$0xf]
      %v747 = vld [vmem:[#allocation3 + $0xdc] sm:$0xf]
      %v748 = vld [vmem:[#allocation3 + $0xe0] sm:$0xf]
      %v749 = vld [vmem:[#allocation3 + $0xe4] sm:$0xf]
      %v750 = vld [vmem:[#allocation3 + $0xe8] sm:$0xf]
      %v751 = vld [vmem:[#allocation3 + $0xec] sm:$0xf]
      %v752 = vld [vmem:[#allocation3 + $0xf0] sm:$0xf]
      %v753 = vld [vmem:[#allocation3 + $0xf4] sm:$0xf]
      %v754 = vld [vmem:[#allocation3 + $0xf8] sm:$0xf]
      %v755 = vld [vmem:[#allocation3 + $0xfc] sm:$0xf]
      %v756 = vld [vmem:[#allocation3 + $0x100] sm:$0xf]
      %v757 = vld [vmem:[#allocation3 + $0x104] sm:$0xf]
      %v758 = vld [vmem:[%s4 + $0x4] sm:$0x1]
      %v759 = vlaneseq
      %v760 = vshrl.u32 %v759, 7
      %v761 = vsub.s32 0, %v760
      %v762 = vrot.slane %v758, %v761
      %v779 = vunpack.c.l.b16 %v742
      %v780 = vunpack.c.l.b16 %v743
      %v781 = vunpack.c.l.b16 %v744
      %v782 = vunpack.c.l.b16 %v745
      %v783 = vunpack.c.l.b16 %v746
      %v784 = vunpack.c.l.b16 %v747
      %v785 = vunpack.c.l.b16 %v748
      %v786 = vunpack.c.l.b16 %v749
      %v787 = vunpack.c.l.b16 %v750
      %v788 = vunpack.c.l.b16 %v751
      %v789 = vunpack.c.l.b16 %v752
      %v790 = vunpack.c.l.b16 %v753
      %v791 = vunpack.c.l.b16 %v754
      %v792 = vunpack.c.l.b16 %v755
      %v793 = vunpack.c.l.b16 %v756
      %v794 = vunpack.c.l.b16 %v757
      %v795 = vpack.c.b16 %v780, %v779
      %v796 = vpack.c.b16 %v782, %v781
      %v797 = vpack.c.b16 %v784, %v783
      %v798 = vpack.c.b16 %v786, %v785
      %v799 = vpack.c.b16 %v788, %v787
      %v800 = vpack.c.b16 %v790, %v789
      %v801 = vpack.c.b16 %v792, %v791
      %v802 = vpack.c.b16 %v794, %v793
      %811 = vmatprep.subr.bf16.mxu0 0
      %812 = vmatpush1.bf16.msra.mxu0 %v802
      %813 = vmatprep.subr.bf16.mxu0 0
      %814 = vmatpush1.bf16.msra.mxu0 %v801
      %815 = vmatprep.subr.bf16.mxu0 0
      %816 = vmatpush1.bf16.msra.mxu0 %v800
      %817 = vmatprep.subr.bf16.mxu0 0
      %818 = vmatpush1.bf16.msra.mxu0 %v799
      %819 = vmatprep.subr.bf16.mxu0 0
      %820 = vmatpush1.bf16.msra.mxu0 %v798
      %821 = vmatprep.subr.bf16.mxu0 0
      %822 = vmatpush1.bf16.msra.mxu0 %v797
      %823 = vmatprep.subr.bf16.mxu0 0
      %824 = vmatpush1.bf16.msra.mxu0 %v796
      %825 = vmatprep.subr.bf16.mxu0 0
      %826 = vmatpush1.bf16.msra.mxu0 %v795
      %827 = vmatprep.subr.bf16.mxu0 0
      %828 = vmatpush2.bf16.msra.mxu0 0
      %829 = vmatprep.subr.bf16.mxu0 0
      %830 = vmatpush2.bf16.msra.mxu0 0
      %831 = vmatprep.subr.bf16.mxu0 0
      %832 = vmatpush2.bf16.msra.mxu0 0
      %833 = vmatprep.subr.bf16.mxu0 0
      %834 = vmatpush2.bf16.msra.mxu0 0
      %835 = vmatprep.subr.bf16.mxu0 0
      %836 = vmatpush2.bf16.msra.mxu0 0
      %837 = vmatprep.subr.bf16.mxu0 0
      %838 = vmatpush2.bf16.msra.mxu0 0
      %839 = vmatprep.subr.bf16.mxu0 0
      %840 = vmatpush2.bf16.msra.mxu0 0
      %841 = vmatprep.subr.bf16.mxu0 0
      %842 = vmatpush2.bf16.msra.mxu0 0
      %843 = vmatprep.mubr.bf16.mxu0 0
      %844 = vmatmul.mubr.bf16.gmra.mxu0 %v741
      %v845 = vpop.f32.mrf.mxu0
      %v846 = vadd.f32 %v762, %v845
      %v847 = vpop.f32.mrf.mxu0
      %v848 = vpop.f32.mrf.mxu0
      %v849 = vpop.f32.mrf.mxu0
      %850 = vdwg.mxu0
      %v851 = vmax.f32 %v846, 0.0
      %v852 = vpack.c.bf16 %v851, %v851
      %v853 = vld [vmem:[#allocation3 + $0x108] sm:$0xf]
      %v854 = vld [vmem:[#allocation3 + $0x10c] sm:$0xf]
      %v855 = vld [vmem:[#allocation3 + $0x110] sm:$0xf]
      %v856 = vld [vmem:[#allocation3 + $0x114] sm:$0xf]
      %v857 = vld [vmem:[#allocation3 + $0x118] sm:$0xf]
      %v858 = vld [vmem:[#allocation3 + $0x11c] sm:$0xf]
      %v859 = vld [vmem:[#allocation3 + $0x120] sm:$0xf]
      %v860 = vld [vmem:[#allocation3 + $0x124] sm:$0xf]
      %v861 = vld [vmem:[#allocation3 + $0x128] sm:$0xf]
      %v862 = vld [vmem:[#allocation3 + $0x12c] sm:$0xf]
      %v863 = vld [vmem:[#allocation3 + $0x130] sm:$0xf]
      %v864 = vld [vmem:[#allocation3 + $0x134] sm:$0xf]
      %v865 = vld [vmem:[#allocation3 + $0x138] sm:$0xf]
      %v866 = vld [vmem:[#allocation3 + $0x13c] sm:$0xf]
      %v867 = vld [vmem:[#allocation3 + $0x140] sm:$0xf]
      %v868 = vld [vmem:[#allocation3 + $0x144] sm:$0xf]
      %v869 = vld [vmem:[%s4 + $0x5] sm:$0x1]
      %v870 = vlaneseq
      %v871 = vshrl.u32 %v870, 7
      %v872 = vsub.s32 0, %v871
      %v873 = vrot.slane %v869, %v872
      %v890 = vunpack.c.l.b16 %v853
      %v891 = vunpack.c.l.b16 %v854
      %v892 = vunpack.c.l.b16 %v855
      %v893 = vunpack.c.l.b16 %v856
      %v894 = vunpack.c.l.b16 %v857
      %v895 = vunpack.c.l.b16 %v858
      %v896 = vunpack.c.l.b16 %v859
      %v897 = vunpack.c.l.b16 %v860
      %v898 = vunpack.c.l.b16 %v861
      %v899 = vunpack.c.l.b16 %v862
      %v900 = vunpack.c.l.b16 %v863
      %v901 = vunpack.c.l.b16 %v864
      %v902 = vunpack.c.l.b16 %v865
      %v903 = vunpack.c.l.b16 %v866
      %v904 = vunpack.c.l.b16 %v867
      %v905 = vunpack.c.l.b16 %v868
      %v906 = vpack.c.b16 %v891, %v890
      %v907 = vpack.c.b16 %v893, %v892
      %v908 = vpack.c.b16 %v895, %v894
      %v909 = vpack.c.b16 %v897, %v896
      %v910 = vpack.c.b16 %v899, %v898
      %v911 = vpack.c.b16 %v901, %v900
      %v912 = vpack.c.b16 %v903, %v902
      %v913 = vpack.c.b16 %v905, %v904
      %922 = vmatprep.subr.bf16.mxu0 0
      %923 = vmatpush1.bf16.msra.mxu0 %v913
      %924 = vmatprep.subr.bf16.mxu0 0
      %925 = vmatpush1.bf16.msra.mxu0 %v912
      %926 = vmatprep.subr.bf16.mxu0 0
      %927 = vmatpush1.bf16.msra.mxu0 %v911
      %928 = vmatprep.subr.bf16.mxu0 0
      %929 = vmatpush1.bf16.msra.mxu0 %v910
      %930 = vmatprep.subr.bf16.mxu0 0
      %931 = vmatpush1.bf16.msra.mxu0 %v909
      %932 = vmatprep.subr.bf16.mxu0 0
      %933 = vmatpush1.bf16.msra.mxu0 %v908
      %934 = vmatprep.subr.bf16.mxu0 0
      %935 = vmatpush1.bf16.msra.mxu0 %v907
      %936 = vmatprep.subr.bf16.mxu0 0
      %937 = vmatpush1.bf16.msra.mxu0 %v906
      %938 = vmatprep.subr.bf16.mxu0 0
      %939 = vmatpush2.bf16.msra.mxu0 0
      %940 = vmatprep.subr.bf16.mxu0 0
      %941 = vmatpush2.bf16.msra.mxu0 0
      %942 = vmatprep.subr.bf16.mxu0 0
      %943 = vmatpush2.bf16.msra.mxu0 0
      %944 = vmatprep.subr.bf16.mxu0 0
      %945 = vmatpush2.bf16.msra.mxu0 0
      %946 = vmatprep.subr.bf16.mxu0 0
      %947 = vmatpush2.bf16.msra.mxu0 0
      %948 = vmatprep.subr.bf16.mxu0 0
      %949 = vmatpush2.bf16.msra.mxu0 0
      %950 = vmatprep.subr.bf16.mxu0 0
      %951 = vmatpush2.bf16.msra.mxu0 0
      %952 = vmatprep.subr.bf16.mxu0 0
      %953 = vmatpush2.bf16.msra.mxu0 0
      %954 = vmatprep.mubr.bf16.mxu0 0
      %955 = vmatmul.mubr.bf16.gmra.mxu0 %v852
      %v956 = vpop.f32.mrf.mxu0
      %v957 = vadd.f32 %v873, %v956
      %v958 = vpop.f32.mrf.mxu0
      %v959 = vpop.f32.mrf.mxu0
      %v960 = vpop.f32.mrf.mxu0
      %961 = vdwg.mxu0
      %v962 = vmax.f32 %v957, 0.0
      %v963 = vand.u32 2147483647, %v957
      %v964 = vsub.f32 0.0, %v963
      %v965 = vmul.f32 %v964, 1.442695
      %v966 = vpow.pop %v965
      %v967 = vadd.f32 %v966, 1.0
      %v968 = vlog2.pop %v967
      %v969 = vmul.f32 %v968, 0.6931472
      %v970 = vadd.f32 %v962, %v969
      %vm971 = vcmask 64512
      %972 = vst.msk [vmem:[#allocation6] sm:$0xff] %vm971, %v970
    $region33: #{tpu_custom_call.1} parent=1 // pred_fallthru
      _
    // Predicated region
    $region34: #{tpu_custom_call.1} parent=1 // pred_check
      _
    $region35: #{tpu_custom_call.1} parent=1 // pred_check_branch
      %974 = sbr.rel (0) target = $region37
    $region36: #{tpu_custom_call.1} parent=1 // pred_region
      %s976 = ssub.s32 128, 128
      %977 = vsyncadd [#allocation5], %s976
      %s979 = sshll.u32 [#allocation6], 4
      %s980 = int_to_ptr.vmem [resolvable:$true] %s979
      %982 = dma.vmem_to_hbm [thread:$0]  %s980, 128, %s5, [#allocation5]
    $region37: #{tpu_custom_call.1} parent=1 // pred_fallthru
      _
    // Predicated region
    $region38: #{tpu_custom_call.1} parent=1 // pred_check
      _
    $region39: #{tpu_custom_call.1} parent=1 // pred_check_branch
      %984 = sbr.rel (0) target = $region41
    $region40: #{tpu_custom_call.1} parent=1 // pred_region
      %985 = dma.done [#allocation5], 128
    $region41: #{tpu_custom_call.1} parent=1 // pred_fallthru
      _
    %986 = vsyncpa [#allocation4], 1
    %987 = vsyncpa [#allocation5], 1

</llo_original>
